<compile_context>
chip_gen: v6e
topology: v6e:2x2x1
jax: 0.10.0
libtpu: 0.0.40
codegen_flags: <defaults>
</compile_context>

<pallas_src>
import jax
import jax.numpy as jnp
from jax.experimental import pallas as pl
from jax.experimental.pallas import tpu as pltpu


def _round_up(v: int, m: int) -> int:
    return ((v + m - 1) // m) * m


def _make_one_hot_kernel(cardinalities, offsets, tile_b, total):
    cards = list(cardinalities)
    offs = list(offsets)

    def kernel(x_ref, out_ref):
        x = x_ref[...]  # (tile_b, n_cols) int32
        # Constant lane iota over the full one-hot width.
        lane = jax.lax.broadcasted_iota(jnp.int32, (tile_b, total), 1)
        acc = None
        # n_cols is small and static -> fully unrolled at trace time.
        for c, off in enumerate(offs):
            col = x[:, c:c + 1]                              # (tile_b, 1)
            # Fold the column offset and the missing(-1) handling into a
            # narrow per-row target lane; -1 can never match the iota.
            target = jnp.where(col < 0, jnp.int32(-1), col + jnp.int32(off))
            hit = lane == target                             # full-width compare
            acc = hit if acc is None else (acc | hit)        # full-width OR
        out_ref[...] = acc.astype(out_ref.dtype)

    return kernel


def one_hot_encode(x: jax.Array, cardinalities, *, tile_b: int | None = None,
                   out_dtype=jnp.int32):
    """x: (..., n_cols) int -> (..., sum(cardinalities)) one-hot (0/1, out_dtype)."""
    cards = [int(c) for c in cardinalities]
    n_cols = len(cards)
    assert n_cols > 0
    total = sum(cards)
    offsets = []
    off = 0
    for c in cards:
        offsets.append(off)
        off += c

    lead_shape = x.shape[:-1]
    assert x.shape[-1] == n_cols, "last dim of x must equal len(cardinalities)"
    x2 = x.reshape(-1, n_cols).astype(jnp.int32)
    B = x2.shape[0]

    # Tile selection: multiple of 8, aim for >= ~4 grid steps, VMEM-capped
    # (2x in + 2x out double buffers kept well under the scoped default,
    #  conservative enough for v7x's smaller 64 MiB VMEM).
    if tile_b is None:
        tile_b = min(512, _round_up(max(1, B // 4), 8))
    tile_b = max(8, _round_up(int(tile_b), 8))
    bytes_per_row = 4 * (n_cols + total)
    while tile_b > 8 and 4 * tile_b * bytes_per_row > (8 << 20):
        tile_b = max(8, _round_up(tile_b // 2, 8))

    B_pad = _round_up(B, tile_b)
    if B_pad != B:
        x2 = jnp.pad(x2, ((0, B_pad - B), (0, 0)), constant_values=-1)

    grid = (B_pad // tile_b,)
    kernel = _make_one_hot_kernel(cards, offsets, tile_b, total)

    cost = pl.CostEstimate(
        flops=2 * B_pad * total * n_cols,
        transcendentals=0,
        bytes_accessed=4 * B_pad * (n_cols + total),
    )

    out = pl.pallas_call(
        kernel,
        out_shape=jax.ShapeDtypeStruct((B_pad, total), out_dtype),
        grid_spec=pltpu.PrefetchScalarGridSpec(
            num_scalar_prefetch=0,
            grid=grid,
            in_specs=[pl.BlockSpec((tile_b, n_cols), lambda i: (i, 0))],
            out_specs=pl.BlockSpec((tile_b, total), lambda i: (i, 0)),
        ),
        compiler_params=pltpu.CompilerParams(
            dimension_semantics=("parallel",),
        ),
        cost_estimate=cost,
    )(x2)

    out = out[:B]
    return out.reshape(*lead_shape, total)


def _reference(x, cardinalities):
    cols = []
    for c, card in enumerate(cardinalities):
        v = x[..., c]
        idx = jnp.where(v == -1, 0, v)
        oh = jax.nn.one_hot(idx, card, dtype=jnp.int32)
        oh = jnp.where((v == -1)[..., None], 0, oh)
        cols.append(oh)
    return jnp.concatenate(cols, axis=-1)


if __name__ == "__main__":
    cardinalities = [3, 5, 4, 7]   # total one-hot width = 19
    batch = 64

    key = jax.random.PRNGKey(0)
    keys = jax.random.split(key, len(cardinalities) + 1)
    cols = [
        jax.random.randint(keys[i], (batch,), 0, card, dtype=jnp.int32)
        for i, card in enumerate(cardinalities)
    ]
    x = jnp.stack(cols, axis=-1)
    # Inject some missing values (-1), which must map to all-zero rows.
    missing = jax.random.bernoulli(keys[-1], 0.2, (batch, len(cardinalities)))
    x = jnp.where(missing, jnp.int32(-1), x)

    out = one_hot_encode(x, cardinalities)
    out = jax.block_until_ready(out)

    ref = _reference(x, cardinalities)
    assert out.shape == (batch, sum(cardinalities))
    assert jnp.array_equal(out, ref), "mismatch vs reference"

    print("KERNEL_OK")
</pallas_src>

<mosaic_0001>
module attributes {stable_mosaic.version = 11 : i64} {
  func.func @kernel(%arg0: i32, %arg1: memref<16x4xi32, #tpu.memory_space<vmem>>, %arg2: memref<16x19xi32, #tpu.memory_space<vmem>>) attributes {dimension_semantics = [#tpu.dimension_semantics<parallel>], iteration_bounds = array<i64: 4>, scalar_prefetch = 0 : i64, scratch_operands = 0 : i64, tpu.core_type = #tpu.core_type<tc>, window_params = [{transform_indices = @transform_0, window_bounds = array<i64: 16, 4>}, {transform_indices = @transform_1, window_bounds = array<i64: 16, 19>}]} {
    %c0 = arith.constant 0 : index
    %c0_0 = arith.constant 0 : index
    %0 = vector.load %arg1[%c0, %c0_0] : memref<16x4xi32, #tpu.memory_space<vmem>>, vector<16x4xi32>
    %1 = tpu.iota {dimensions = array<i32: 1>} : vector<16x19xi32>
    %2 = vector.extract_strided_slice %0 {offsets = [0, 0], sizes = [16, 1], strides = [1, 1]} : vector<16x4xi32> to vector<16x1xi32>
    %c0_i32 = arith.constant 0 : i32
    %3 = vector.broadcast %c0_i32 : i32 to vector<16x1xi32>
    %4 = arith.cmpi slt, %2, %3 : vector<16x1xi32>
    %c0_i32_1 = arith.constant 0 : i32
    %5 = vector.broadcast %c0_i32_1 : i32 to vector<16x1xi32>
    %6 = arith.addi %2, %5 : vector<16x1xi32>
    %c-1_i32 = arith.constant -1 : i32
    %7 = vector.broadcast %c-1_i32 : i32 to vector<16x1xi32>
    %8 = arith.select %4, %7, %6 : vector<16x1xi1>, vector<16x1xi32>
    %9 = vector.broadcast %8 : vector<16x1xi32> to vector<16x19xi32>
    %10 = arith.cmpi eq, %1, %9 : vector<16x19xi32>
    %11 = vector.extract_strided_slice %0 {offsets = [0, 1], sizes = [16, 1], strides = [1, 1]} : vector<16x4xi32> to vector<16x1xi32>
    %c0_i32_2 = arith.constant 0 : i32
    %12 = vector.broadcast %c0_i32_2 : i32 to vector<16x1xi32>
    %13 = arith.cmpi slt, %11, %12 : vector<16x1xi32>
    %c3_i32 = arith.constant 3 : i32
    %14 = vector.broadcast %c3_i32 : i32 to vector<16x1xi32>
    %15 = arith.addi %11, %14 : vector<16x1xi32>
    %c-1_i32_3 = arith.constant -1 : i32
    %16 = vector.broadcast %c-1_i32_3 : i32 to vector<16x1xi32>
    %17 = arith.select %13, %16, %15 : vector<16x1xi1>, vector<16x1xi32>
    %18 = vector.broadcast %17 : vector<16x1xi32> to vector<16x19xi32>
    %19 = arith.cmpi eq, %1, %18 : vector<16x19xi32>
    %20 = arith.ori %10, %19 : vector<16x19xi1>
    %21 = vector.extract_strided_slice %0 {offsets = [0, 2], sizes = [16, 1], strides = [1, 1]} : vector<16x4xi32> to vector<16x1xi32>
    %c0_i32_4 = arith.constant 0 : i32
    %22 = vector.broadcast %c0_i32_4 : i32 to vector<16x1xi32>
    %23 = arith.cmpi slt, %21, %22 : vector<16x1xi32>
    %c8_i32 = arith.constant 8 : i32
    %24 = vector.broadcast %c8_i32 : i32 to vector<16x1xi32>
    %25 = arith.addi %21, %24 : vector<16x1xi32>
    %c-1_i32_5 = arith.constant -1 : i32
    %26 = vector.broadcast %c-1_i32_5 : i32 to vector<16x1xi32>
    %27 = arith.select %23, %26, %25 : vector<16x1xi1>, vector<16x1xi32>
    %28 = vector.broadcast %27 : vector<16x1xi32> to vector<16x19xi32>
    %29 = arith.cmpi eq, %1, %28 : vector<16x19xi32>
    %30 = arith.ori %20, %29 : vector<16x19xi1>
    %31 = vector.extract_strided_slice %0 {offsets = [0, 3], sizes = [16, 1], strides = [1, 1]} : vector<16x4xi32> to vector<16x1xi32>
    %c0_i32_6 = arith.constant 0 : i32
    %32 = vector.broadcast %c0_i32_6 : i32 to vector<16x1xi32>
    %33 = arith.cmpi slt, %31, %32 : vector<16x1xi32>
    %c12_i32 = arith.constant 12 : i32
    %34 = vector.broadcast %c12_i32 : i32 to vector<16x1xi32>
    %35 = arith.addi %31, %34 : vector<16x1xi32>
    %c-1_i32_7 = arith.constant -1 : i32
    %36 = vector.broadcast %c-1_i32_7 : i32 to vector<16x1xi32>
    %37 = arith.select %33, %36, %35 : vector<16x1xi1>, vector<16x1xi32>
    %38 = vector.broadcast %37 : vector<16x1xi32> to vector<16x19xi32>
    %39 = arith.cmpi eq, %1, %38 : vector<16x19xi32>
    %40 = arith.ori %30, %39 : vector<16x19xi1>
    %41 = arith.extui %40 : vector<16x19xi1> to vector<16x19xi32>
    %c0_8 = arith.constant 0 : index
    %c0_9 = arith.constant 0 : index
    %42 = vector.load %arg2[%c0_8, %c0_9] : memref<16x19xi32, #tpu.memory_space<vmem>>, vector<16x19xi32>
    tpu.vector_store %arg2[%c0_8, %c0_9], %41 {strides = array<i32>} : memref<16x19xi32, #tpu.memory_space<vmem>>, vector<16x19xi32>,
    return
  }
  func.func @transform_0(%arg0: i32) -> (i32, i32) {
    %c0_i32 = arith.constant 0 : i32
    %c0_i32_0 = arith.constant 0 : i32
    return %arg0, %c0_i32 : i32, i32
  }
  func.func @transform_1(%arg0: i32) -> (i32, i32) {
    %c0_i32 = arith.constant 0 : i32
    %c0_i32_0 = arith.constant 0 : i32
    return %arg0, %c0_i32 : i32, i32
  }
}

</mosaic_0001>

<llo_original>
// kernel: tpu_custom_call.1
$region0: #{tpu_custom_call.1}
  #allocation0 [shape = 'u32[]', space=smem, size = 0x4, offset = 0x4, fixed_abs, tag = 'smem constant byte address 0x4 - core index']
  #allocation1 [shape = 'u32[144,128]{1,0:T(1,128)}', space=vmem, size = 0x12000, scoped, tag = 'internal scratch']
  %s0 = inlined_call_operand.vmem [shape: s32[64,4], index: 0, kind: input, shape index: {}]
  %s1 = inlined_call_operand.vmem [shape: s32[64,19], index: 1, kind: output, shape index: {}]
  %s2 = sld [smem:[#allocation0]]
  $region37: #{tpu_custom_call.1} parent=0
    _
  %s4 = ssub.s32 1, %s2
  %s5 = scalar_select 0, %s4, %s2
  loop: start=0, step=1, limit=6
  $region2: #{tpu_custom_call.1} parent=0 // loop_pre_header
    _
  $region3: #{tpu_custom_call.1} parent=0 // loop_header
    %s7 = sphi 0, %s11
    %p8 = scmp.ge.s32.totalorder %s7, 6
    %s17 = sphi 0, %s19
    %s20 = sphi 0, %s17
    %s21 = sphi 0, %s20
    %s37 = sphi 0, %s21
    %s43 = sphi 0, %s45
    %s46 = sphi 0, %s43
    %s47 = sphi 0, %s46
    %s63 = sphi 0, %s47
  $region4: #{tpu_custom_call.1} parent=0 // loop_header_branch
    %10 = sbr.rel (%p8) target = $region8
  $region5: #{tpu_custom_call.1} parent=0 // loop_body
    %s12 = ssub.s32 %s7, 1
    %s13 = ssub.s32 %s7, 2
    %s14 = sadd.s32 %s7, 1
    %s15 = ssub.s32 %s7, %s14
    %p16 = scmp.eq.s32.totalorder %s15, 0
    %s18 = sadd.s32 %s17, 1
    %s19 = scalar_select %p16, %s17, %s18
    %p22 = pneg %p16
    %p23 = scmp.eq.s32.totalorder %s7, 3
    %p24 = por %p22, %p23
    %p25 = scmp.ne.s32.totalorder %s17, %s20
    %p26 = scmp.eq.s32.totalorder %s7, 0
    %p27 = por %p25, %p26
    %p28 = scmp.ne.s32.totalorder %s17, %s20
    %p29 = scmp.eq.s32.totalorder %s12, 3
    %p30 = por %p28, %p29
    %p31 = scmp.ne.s32.totalorder %s20, %s21
    %p32 = scmp.eq.s32.totalorder %s12, 0
    %p33 = por %p31, %p32
    %p34 = scmp.ne.s32.totalorder %s20, %s21
    %p35 = scmp.eq.s32.totalorder %s13, 3
    %p36 = por %p34, %p35
    %p38 = scmp.ne.s32.totalorder %s21, %s37
    %p39 = scmp.eq.s32.totalorder %s13, 0
    %p40 = por %p38, %p39
    %s41 = ssub.s32 %s7, %s14
    %p42 = scmp.eq.s32.totalorder %s41, 0
    %s44 = sadd.s32 %s43, 1
    %s45 = scalar_select %p42, %s43, %s44
    %p48 = pneg %p42
    %p49 = scmp.eq.s32.totalorder %s7, 3
    %p50 = por %p48, %p49
    %p51 = scmp.ne.s32.totalorder %s43, %s46
    %p52 = scmp.eq.s32.totalorder %s7, 0
    %p53 = por %p51, %p52
    %p54 = scmp.ne.s32.totalorder %s43, %s46
    %p55 = scmp.eq.s32.totalorder %s12, 3
    %p56 = por %p54, %p55
    %p57 = scmp.ne.s32.totalorder %s46, %s47
    %p58 = scmp.eq.s32.totalorder %s12, 0
    %p59 = por %p57, %p58
    %p60 = scmp.ne.s32.totalorder %s46, %s47
    %p61 = scmp.eq.s32.totalorder %s13, 3
    %p62 = por %p60, %p61
    %p64 = scmp.ne.s32.totalorder %s47, %s63
    %p65 = scmp.eq.s32.totalorder %s13, 0
    %p66 = por %p64, %p65
    %p67 = scmp.le.s32.totalorder 1, %s7
    %p68 = scmp.lt.s32.totalorder %s7, 5
    %p69 = pnand %p67, %p68
    %p70 = pneg %p69
    // Predicated region
    $region9: #{tpu_custom_call.1} parent=5 // pred_check
      _
    $region10: #{tpu_custom_call.1} parent=5 // pred_check_branch
      %72 = sbr.rel (%p69) target = $region12
    $region11: #{tpu_custom_call.1} parent=5 // pred_region
      %s73 = ssub.s32 %s7, 1
    $region12: #{tpu_custom_call.1} parent=5 // pred_fallthru
      _
    %p74 = scmp.lt.s32.totalorder %s7, 4
    // Predicated region
    $region13: #{tpu_custom_call.1} parent=5 // pred_check
      %p75 = pneg %p74
    $region14: #{tpu_custom_call.1} parent=5 // pred_check_branch
      %77 = sbr.rel (%p75) target = $region16
    $region15: #{tpu_custom_call.1} parent=5 // pred_region
      // Predicated region
      $region17: #{tpu_custom_call.1} parent=15 // pred_check
        %p78 = pneg %p27
      $region18: #{tpu_custom_call.1} parent=15 // pred_check_branch
        %80 = sbr.rel (%p78) target = $region20
      $region19: #{tpu_custom_call.1} parent=15 // pred_region
        %s81 = smul.u32 2, %s7
        %p82 = scmp.lt.s32.totalorder %s81, 7
        %s83 = scalar_select %p82, %s81, 7
        %s84 = smul.addr %s83, 8
        %s85 = scalar_lea.vmem %s0, %s84
        %s86 = smul.u32 2, %s7
      $region20: #{tpu_custom_call.1} parent=15 // pred_fallthru
        _
    $region16: #{tpu_custom_call.1} parent=5 // pred_fallthru
      _
    %p87 = scmp.le.s32.totalorder 1, %s7
    %p88 = scmp.lt.s32.totalorder %s7, 5
    %p89 = pnand %p87, %p88
    %p90 = pneg %p89
    // Predicated region
    $region21: #{tpu_custom_call.1} parent=5 // pred_check
      _
    $region22: #{tpu_custom_call.1} parent=5 // pred_check_branch
      %92 = sbr.rel (%p89) target = $region24
    $region23: #{tpu_custom_call.1} parent=5 // pred_region
      %s93 = ssub.s32 %s7, 1
      %s94 = smul.u32 2, %s12
      %p95 = scmp.lt.s32.totalorder %s94, 7
      %s96 = scalar_select %p95, %s94, 7
      %s97 = smul.addr %s96, 8
      %s98 = scalar_lea.vmem %s0, %s97
      %p99 = pneg %p33
      %p100 = pneg %p30
      %p101 = pneg %p59
      %p102 = pneg %p56
      %s103 = smul.u32 2, %s12
      %p104 = scmp.lt.s32.totalorder %s103, 7
      %s105 = scalar_select %p104, %s103, 7
      %s106 = smul.addr %s105, 8
      %s107 = scalar_lea.vmem %s1, %s106
      %s108 = smul.u32 2, %s12
      %p109 = scmp.lt.s32.totalorder %s108, 7
      %s110 = scalar_select %p109, %s108, 7
      %s111 = smul.addr %s110, 8
      %s112 = scalar_lea.vmem %s0, %s111
      %s113 = smul.u32 2, %s12
      %s114 = smul.u32 2, %s12
      %p115 = scmp.lt.s32.totalorder %s114, 7
      %s116 = scalar_select %p115, %s114, 7
      %s117 = smul.addr %s116, 8
      %s118 = scalar_lea.vmem %s1, %s117
      %s119 = smul.u32 2, %s12
      %v120 = vld [vmem:[%s112] sm:$0xff]
      %v121 = vld [vmem:[%s112 + $0x8] sm:$0xff]
      %v122 = vlaneseq
      %v123 = vand.u32 %v122, 127
      %vm124 = vcmp.lt.s32.totalorder %v120, 0
      %vm125 = vcmp.lt.s32.totalorder %v121, 0
      %v126 = vsel %vm124, 4294967295, %v120
      %v127 = vsel %vm125, 4294967295, %v121
      %128 = vset.pattern.permute.xlu0 0
      %129 = vperm.xlu0 %128, %v126
      %v130 = vpop.permute.xlu0 %129
      %131 = vset.pattern.permute.xlu0 0
      %132 = vperm.xlu0 %131, %v127
      %v133 = vpop.permute.xlu0 %132
      %vm134 = vcmp.eq.s32.totalorder %v123, %v130
      %vm135 = vcmp.eq.s32.totalorder %v123, %v133
      %v136 = vadd.s32 %v120, 3
      %v137 = vadd.s32 %v121, 3
      %v138 = vsel %vm124, 4294967295, %v136
      %v139 = vsel %vm125, 4294967295, %v137
      %140 = vset.pattern.permute.xlu0 1
      %141 = vperm.xlu0 %140, %v138
      %v142 = vpop.permute.xlu0 %141
      %143 = vset.pattern.permute.xlu0 1
      %144 = vperm.xlu0 %143, %v139
      %v145 = vpop.permute.xlu0 %144
      %vm146 = vcmp.eq.s32.totalorder %v123, %v142
      %vm147 = vcmp.eq.s32.totalorder %v123, %v145
      %vm148 = vmor %vm134, %vm146
      %vm149 = vmor %vm135, %vm147
      %v150 = vadd.s32 %v120, 8
      %v151 = vadd.s32 %v121, 8
      %v152 = vsel %vm124, 4294967295, %v150
      %v153 = vsel %vm125, 4294967295, %v151
      %154 = vset.pattern.permute.xlu0 2
      %155 = vperm.xlu0 %154, %v152
      %v156 = vpop.permute.xlu0 %155
      %157 = vset.pattern.permute.xlu0 2
      %158 = vperm.xlu0 %157, %v153
      %v159 = vpop.permute.xlu0 %158
      %vm160 = vcmp.eq.s32.totalorder %v123, %v156
      %vm161 = vcmp.eq.s32.totalorder %v123, %v159
      %vm162 = vmor %vm148, %vm160
      %vm163 = vmor %vm149, %vm161
      %v164 = vadd.s32 %v120, 12
      %v165 = vadd.s32 %v121, 12
      %v166 = vsel %vm124, 4294967295, %v164
      %v167 = vsel %vm125, 4294967295, %v165
      %168 = vset.pattern.permute.xlu0 3
      %169 = vperm.xlu0 %168, %v166
      %v170 = vpop.permute.xlu0 %169
      %171 = vset.pattern.permute.xlu0 3
      %172 = vperm.xlu0 %171, %v167
      %v173 = vpop.permute.xlu0 %172
      %vm174 = vcmp.eq.s32.totalorder %v123, %v170
      %vm175 = vcmp.eq.s32.totalorder %v123, %v173
      %vm176 = vmor %vm162, %vm174
      %vm177 = vmor %vm163, %vm175
      %v178 = vsel %vm176, 1, 0
      %v179 = vsel %vm177, 1, 0
      %vm180 = vcmask 154624
      %181 = vst.msk [vmem:[%s118] sm:$0xff] %vm180, %v178
      %182 = vst.msk [vmem:[%s118 + $0x8] sm:$0xff] %vm180, %v179
      %s183 = smul.u32 2, %s12
      %p184 = scmp.lt.s32.totalorder %s183, 7
      %s185 = scalar_select %p184, %s183, 7
      %s186 = smul.addr %s185, 8
      %s187 = scalar_lea.vmem %s1, %s186
      // Predicated region
      $region25: #{tpu_custom_call.1} parent=23 // pred_check
        %p188 = pneg %p56
      $region26: #{tpu_custom_call.1} parent=23 // pred_check_branch
        %190 = sbr.rel (%p188) target = $region28
      $region27: #{tpu_custom_call.1} parent=23 // pred_region
        %s191 = smul.u32 2, %s12
      $region28: #{tpu_custom_call.1} parent=23 // pred_fallthru
        _
    $region24: #{tpu_custom_call.1} parent=5 // pred_fallthru
      _
    %p192 = scmp.le.s32.totalorder 2, %s7
    // Predicated region
    $region29: #{tpu_custom_call.1} parent=5 // pred_check
      %p193 = pneg %p192
    $region30: #{tpu_custom_call.1} parent=5 // pred_check_branch
      %195 = sbr.rel (%p193) target = $region32
    $region31: #{tpu_custom_call.1} parent=5 // pred_region
      %s196 = ssub.s32 %s7, 2
      // Predicated region
      $region33: #{tpu_custom_call.1} parent=31 // pred_check
        %p197 = pneg %p62
      $region34: #{tpu_custom_call.1} parent=31 // pred_check_branch
        %199 = sbr.rel (%p197) target = $region36
      $region35: #{tpu_custom_call.1} parent=31 // pred_region
        %s200 = smul.u32 2, %s13
        %p201 = scmp.lt.s32.totalorder %s200, 7
        %s202 = scalar_select %p201, %s200, 7
        %s203 = smul.addr %s202, 8
        %s204 = scalar_lea.vmem %s1, %s203
      $region36: #{tpu_custom_call.1} parent=31 // pred_fallthru
        _
    $region32: #{tpu_custom_call.1} parent=5 // pred_fallthru
      _
  $region6: #{tpu_custom_call.1} parent=0 // loop_footer
    %s11 = sadd.s32 1, %s7
  $region7: #{tpu_custom_call.1} parent=0 // loop_footer_branch
    %6 = sbr.rel target = $region3
  $region8: #{tpu_custom_call.1} parent=0 // loop_exit
    _

</llo_original>
